<compile_context>
chip_gen: v5e
topology: v5e:2x2
jax: 0.10.0
libtpu: 0.0.40
codegen_flags: <defaults>
</compile_context>

<pallas_src>
import functools

import jax
import jax.numpy as jnp
from jax import lax
from jax.experimental import pallas as pl
from jax.experimental.pallas import tpu as pltpu


def _round_up(x, m):
    return ((x + m - 1) // m) * m


# Contraction on dim 1 of both operands: x @ W.T without materialising W.T.
_DIMS_XWT = (((1,), (1,)), ((), ()))


def _cell_compute(state, obs_task, obs_sup, A, E, *, n_state, n_task, n_sup_comp):
    """One HCNN_compressed cell step on in-vreg values (all f32)."""
    f32 = jnp.float32
    B = state.shape[0]

    # eye_task = eye(n_task, n_state)      -> expectation_task = first n_task cols
    # eye_support = [0 | I_(n_sup_comp)]   -> expectation_support = last n_sup_comp cols
    exp_task = state[:, :n_task]
    exp_sup = state[:, n_state - n_sup_comp:]

    # support_compressed = obs_sup @ E.T   (MXU, f32 accumulation)
    sup_comp = lax.dot_general(obs_sup, E, _DIMS_XWT, preferred_element_type=f32)

    out_task = exp_task - obs_task                       # (B, n_task)
    out_sup = exp_sup - sup_comp                         # (B, n_sup_comp)

    # tf_task = out_task @ eye_task    -> out_task scattered into cols [0, n_task)
    # tf_sup  = out_sup  @ eye_support -> out_sup scattered into last n_sup_comp cols
    if n_state > n_task:
        tf_task = jnp.concatenate(
            [out_task, jnp.zeros((B, n_state - n_task), f32)], axis=-1)
    else:
        tf_task = out_task
    if n_state > n_sup_comp:
        tf_sup = jnp.concatenate(
            [jnp.zeros((B, n_state - n_sup_comp), f32), out_sup], axis=-1)
    else:
        tf_sup = out_sup

    s = jnp.tanh(state - tf_task - tf_sup)
    new_state = lax.dot_general(s, A, _DIMS_XWT, preferred_element_type=f32)  # s @ A.T
    return new_state, out_task, out_sup


def _pack_slab(pieces, width):
    """Concatenate pieces along lanes and zero-pad to a lane-dense width."""
    B = pieces[0].shape[0]
    used = sum(p.shape[1] for p in pieces)
    if width > used:
        pieces = list(pieces) + [jnp.zeros((B, width - used), jnp.float32)]
    return jnp.concatenate(pieces, axis=-1)


# ------------------------- single-step kernel -------------------------------

def _hcnn_cell_kernel(state_ref, obs_task_ref, obs_sup_ref, a_ref, e_ref,
                      slab_ref, *, n_state, n_task, n_sup_comp, slab_width):
    state = state_ref[...]          # (B, n_state)
    obs_task = obs_task_ref[...]    # (B, n_task)
    obs_sup = obs_sup_ref[...]      # (B, n_sup)
    A = a_ref[...]                  # (n_state, n_state)
    E = e_ref[...]                  # (n_sup_comp, n_sup)

    new_state, out_task, out_sup = _cell_compute(
        state, obs_task, obs_sup, A, E,
        n_state=n_state, n_task=n_task, n_sup_comp=n_sup_comp)

    # One lane-dense packed store: [new_state | out_task | out_sup | pad]
    slab_ref[...] = _pack_slab([new_state, out_task, out_sup], slab_width)


def hcnn_cell_compressed(state, observation_task, observation_support, A, E):
    """Single HCNNCell_compressed forward step.

    NOTE: exploits that the module's eye_task / eye_support are fixed identity
    selectors; they are not needed as inputs.
    """
    B, n_state = state.shape
    n_task = observation_task.shape[1]
    n_sup_comp = E.shape[0]
    slab_w = _round_up(max(n_state + n_task + n_sup_comp, 128), 128)

    kernel = functools.partial(
        _hcnn_cell_kernel, n_state=n_state, n_task=n_task,
        n_sup_comp=n_sup_comp, slab_width=slab_w)

    vmem = pl.BlockSpec(memory_space=pltpu.MemorySpace.VMEM)
    slab = pl.pallas_call(
        kernel,
        out_shape=jax.ShapeDtypeStruct((B, slab_w), jnp.float32),
        in_specs=[vmem] * 5,
        out_specs=vmem,
    )(state, observation_task, observation_support, A, E)

    new_state = slab[:, :n_state]
    out_task = slab[:, n_state:n_state + n_task]
    out_sup = slab[:, n_state + n_task:n_state + n_task + n_sup_comp]
    return new_state, out_task, out_sup


# --------------------- fused time-loop (recurrent) kernel -------------------

def _hcnn_seq_kernel(state0_ref, obs_task_ref, obs_sup_ref, a_ref, e_ref,
                     slab_ref, state_scr,
                     *, n_state, n_task, n_sup_comp, slab_width):
    t = pl.program_id(0)

    @pl.when(t == 0)
    def _():
        state_scr[...] = state0_ref[...]

    state = state_scr[...]          # carried in VMEM across the whole grid
    obs_task = obs_task_ref[0]      # (B, n_task)   -- per-step block
    obs_sup = obs_sup_ref[0]        # (B, n_sup)    -- per-step block
    A = a_ref[...]
    E = e_ref[...]

    new_state, out_task, out_sup = _cell_compute(
        state, obs_task, obs_sup, A, E,
        n_state=n_state, n_task=n_task, n_sup_comp=n_sup_comp)

    state_scr[...] = new_state
    # Single lane-dense 128-wide store per step; final state is recovered by
    # the wrapper from the last step's slab (no separate sub-128-lane output).
    slab_ref[0] = _pack_slab([new_state, out_task, out_sup], slab_width)


def hcnn_cell_compressed_sequence(state, obs_task_seq, obs_sup_seq, A, E):
    """Run T recurrent HCNN_compressed steps inside one pallas_call.

    obs_task_seq: (T, B, n_task), obs_sup_seq: (T, B, n_sup).
    Returns (final_state, output_task_seq, output_support_seq).
    """
    T, B, n_task = obs_task_seq.shape
    n_state = state.shape[1]
    n_sup = obs_sup_seq.shape[2]
    n_sup_comp = E.shape[0]
    slab_w = _round_up(max(n_state + n_task + n_sup_comp, 128), 128)

    kernel = functools.partial(
        _hcnn_seq_kernel, n_state=n_state, n_task=n_task,
        n_sup_comp=n_sup_comp, slab_width=slab_w)

    grid_spec = pltpu.PrefetchScalarGridSpec(
        num_scalar_prefetch=0,
        grid=(T,),
        in_specs=[
            pl.BlockSpec((B, n_state), lambda t: (0, 0)),          # initial state
            pl.BlockSpec((1, B, n_task), lambda t: (t, 0, 0)),     # obs_task[t]
            pl.BlockSpec((1, B, n_sup), lambda t: (t, 0, 0)),      # obs_sup[t]
            pl.BlockSpec((n_state, n_state), lambda t: (0, 0)),    # A (loaded once)
            pl.BlockSpec((n_sup_comp, n_sup), lambda t: (0, 0)),   # E (loaded once)
        ],
        out_specs=pl.BlockSpec((1, B, slab_w), lambda t: (t, 0, 0)),  # packed per-step outputs
        scratch_shapes=[pltpu.VMEM((B, n_state), jnp.float32)],    # state carry
    )

    slab = pl.pallas_call(
        kernel,
        out_shape=jax.ShapeDtypeStruct((T, B, slab_w), jnp.float32),
        grid_spec=grid_spec,
        compiler_params=pltpu.CompilerParams(dimension_semantics=("arbitrary",)),
    )(state, obs_task_seq, obs_sup_seq, A, E)

    final_state = slab[T - 1, :, :n_state]
    out_task_seq = slab[:, :, n_state:n_state + n_task]
    out_sup_seq = slab[:, :, n_state + n_task:n_state + n_task + n_sup_comp]
    return final_state, out_task_seq, out_sup_seq


# ------------------------------ pure-JAX reference --------------------------

def hcnn_cell_compressed_ref(state, obs_task, obs_sup, A, E, eye_task, eye_sup):
    exp_task = state @ eye_task.T
    exp_sup = state @ eye_sup.T
    sup_comp = obs_sup @ E.T
    out_task = exp_task - obs_task
    out_sup = exp_sup - sup_comp
    tf_task = out_task @ eye_task
    tf_sup = out_sup @ eye_sup
    new_state = jnp.tanh(state - tf_task - tf_sup) @ A.T
    return new_state, out_task, out_sup


if __name__ == "__main__":
    batch = 8
    n_state_neurons = 32
    n_features_task = 8
    n_features_sup = 16
    n_features_sup_comp = 8
    T = 8

    key = jax.random.PRNGKey(0)
    keys = jax.random.split(key, 7)

    state = jax.random.normal(keys[0], (batch, n_state_neurons), dtype=jnp.float32)
    observation_task = jax.random.normal(keys[1], (batch, n_features_task), dtype=jnp.float32)
    observation_support = jax.random.normal(keys[2], (batch, n_features_sup), dtype=jnp.float32)
    A = 0.1 * jax.random.normal(keys[3], (n_state_neurons, n_state_neurons), dtype=jnp.float32)
    E = 0.1 * jax.random.normal(keys[4], (n_features_sup_comp, n_features_sup), dtype=jnp.float32)

    # Identity selectors exactly as constructed by the PyTorch module
    # (used only by the reference; the kernel exploits their structure).
    eye_task = jnp.eye(n_features_task, n_state_neurons, dtype=jnp.float32)
    eye_support = jnp.concatenate(
        [jnp.zeros((n_features_sup_comp, n_state_neurons - n_features_sup_comp), jnp.float32),
         jnp.eye(n_features_sup_comp, dtype=jnp.float32)], axis=1)

    # ---------------- single-step kernel ----------------
    new_state, out_task, out_sup = hcnn_cell_compressed(
        state, observation_task, observation_support, A, E)
    jax.block_until_ready((new_state, out_task, out_sup))

    ref_state, ref_task, ref_sup = hcnn_cell_compressed_ref(
        state, observation_task, observation_support, A, E, eye_task, eye_support)
    assert jnp.allclose(new_state, ref_state, atol=1e-5, rtol=1e-5)
    assert jnp.allclose(out_task, ref_task, atol=1e-5, rtol=1e-5)
    assert jnp.allclose(out_sup, ref_sup, atol=1e-5, rtol=1e-5)

    # ---------------- fused time-loop kernel ----------------
    obs_task_seq = jax.random.normal(keys[5], (T, batch, n_features_task), dtype=jnp.float32)
    obs_sup_seq = jax.random.normal(keys[6], (T, batch, n_features_sup), dtype=jnp.float32)

    fstate, task_seq, sup_seq = hcnn_cell_compressed_sequence(
        state, obs_task_seq, obs_sup_seq, A, E)
    jax.block_until_ready((fstate, task_seq, sup_seq))

    def _step(s, xs):
        ot, osup = xs
        ns, o_t, o_s = hcnn_cell_compressed_ref(s, ot, osup, A, E, eye_task, eye_support)
        return ns, (o_t, o_s)

    ref_fstate, (ref_task_seq, ref_sup_seq) = jax.lax.scan(
        _step, state, (obs_task_seq, obs_sup_seq))

    assert jnp.allclose(fstate, ref_fstate, atol=1e-5, rtol=1e-5)
    assert jnp.allclose(task_seq, ref_task_seq, atol=1e-5, rtol=1e-5)
    assert jnp.allclose(sup_seq, ref_sup_seq, atol=1e-5, rtol=1e-5)

    print("KERNEL_OK")
</pallas_src>

<mosaic_0001>
module attributes {stable_mosaic.version = 11 : i64} {
  func.func @_hcnn_cell_kernel(%arg0: memref<8x32xf32, #tpu.memory_space<vmem>>, %arg1: memref<8x8xf32, #tpu.memory_space<vmem>>, %arg2: memref<8x16xf32, #tpu.memory_space<vmem>>, %arg3: memref<32x32xf32, #tpu.memory_space<vmem>>, %arg4: memref<8x16xf32, #tpu.memory_space<vmem>>, %arg5: memref<8x128xf32, #tpu.memory_space<vmem>>) attributes {dimension_semantics = [], scalar_prefetch = 0 : i64, scratch_operands = 0 : i64, tpu.core_type = #tpu.core_type<tc>} {
    %c0 = arith.constant 0 : index
    %c0_0 = arith.constant 0 : index
    %0 = vector.load %arg0[%c0, %c0_0] : memref<8x32xf32, #tpu.memory_space<vmem>>, vector<8x32xf32>
    %c0_1 = arith.constant 0 : index
    %c0_2 = arith.constant 0 : index
    %1 = vector.load %arg1[%c0_1, %c0_2] : memref<8x8xf32, #tpu.memory_space<vmem>>, vector<8x8xf32>
    %c0_3 = arith.constant 0 : index
    %c0_4 = arith.constant 0 : index
    %2 = vector.load %arg2[%c0_3, %c0_4] : memref<8x16xf32, #tpu.memory_space<vmem>>, vector<8x16xf32>
    %c0_5 = arith.constant 0 : index
    %c0_6 = arith.constant 0 : index
    %3 = vector.load %arg3[%c0_5, %c0_6] : memref<32x32xf32, #tpu.memory_space<vmem>>, vector<32x32xf32>
    %c0_7 = arith.constant 0 : index
    %c0_8 = arith.constant 0 : index
    %4 = vector.load %arg4[%c0_7, %c0_8] : memref<8x16xf32, #tpu.memory_space<vmem>>, vector<8x16xf32>
    %5 = vector.extract_strided_slice %0 {offsets = [0, 0], sizes = [8, 8], strides = [1, 1]} : vector<8x32xf32> to vector<8x8xf32>
    %6 = vector.extract_strided_slice %0 {offsets = [0, 24], sizes = [8, 8], strides = [1, 1]} : vector<8x32xf32> to vector<8x8xf32>
    %cst = arith.constant dense<0.000000e+00> : vector<8x8xf32>
    %7 = tpu.matmul %2, %4, %cst {dimension_numbers = #tpu.dot_dimension_numbers<[1], [1], [0], [0], [0, 0, 1, 0], [], []>} : vector<8x16xf32>, vector<8x16xf32>, vector<8x8xf32> -> vector<8x8xf32>
    %8 = arith.subf %5, %1 : vector<8x8xf32>
    %9 = arith.subf %6, %7 : vector<8x8xf32>
    %cst_9 = arith.constant 0.000000e+00 : f32
    %10 = vector.broadcast %cst_9 : f32 to vector<8x24xf32>
    %11 = tpu.concatenate %8, %10 in 1 : vector<8x8xf32>, vector<8x24xf32> -> vector<8x32xf32>
    %cst_10 = arith.constant 0.000000e+00 : f32
    %12 = vector.broadcast %cst_10 : f32 to vector<8x24xf32>
    %13 = tpu.concatenate %12, %9 in 1 : vector<8x24xf32>, vector<8x8xf32> -> vector<8x32xf32>
    %14 = arith.subf %0, %11 : vector<8x32xf32>
    %15 = arith.subf %14, %13 : vector<8x32xf32>
    %16 = math.tanh %15 : vector<8x32xf32>
    %cst_11 = arith.constant dense<0.000000e+00> : vector<8x32xf32>
    %17 = tpu.matmul %16, %3, %cst_11 {dimension_numbers = #tpu.dot_dimension_numbers<[1], [1], [0], [0], [0, 0, 1, 0], [], []>} : vector<8x32xf32>, vector<32x32xf32>, vector<8x32xf32> -> vector<8x32xf32>
    %cst_12 = arith.constant 0.000000e+00 : f32
    %18 = vector.broadcast %cst_12 : f32 to vector<8x80xf32>
    %19 = tpu.concatenate %17, %8, %9, %18 in 1 : vector<8x32xf32>, vector<8x8xf32>, vector<8x8xf32>, vector<8x80xf32> -> vector<8x128xf32>
    %c0_13 = arith.constant 0 : index
    %c0_14 = arith.constant 0 : index
    %20 = vector.load %arg5[%c0_13, %c0_14] : memref<8x128xf32, #tpu.memory_space<vmem>>, vector<8x128xf32>
    tpu.vector_store %arg5[%c0_13, %c0_14], %19 {strides = array<i32>} : memref<8x128xf32, #tpu.memory_space<vmem>>, vector<8x128xf32>,
    return
  }
}

</mosaic_0001>

<llo_original>
// kernel: tpu_custom_call.1
$region0: #{tpu_custom_call.1}
  #allocation0 [shape = 'u32[]', space=smem, size = 0x4, offset = 0x4, fixed_abs, tag = 'smem constant byte address 0x4 - core index']
  #allocation1 [shape = 'u32[72,128]{1,0:T(1,128)}', space=vmem, size = 0x9000, scoped, tag = 'internal scratch']
  %s0 = inlined_call_operand.hbm [shape: f32[8,32], index: 0, kind: input, shape index: {}]
  %s1 = inlined_call_operand.hbm [shape: f32[8,8], index: 1, kind: input, shape index: {}]
  %s2 = inlined_call_operand.hbm [shape: f32[8,16], index: 2, kind: input, shape index: {}]
  %s3 = inlined_call_operand.hbm [shape: f32[32,32], index: 3, kind: input, shape index: {}]
  %s4 = inlined_call_operand.hbm [shape: f32[8,16], index: 4, kind: input, shape index: {}]
  %s5 = inlined_call_operand.hbm [shape: f32[8,128], index: 5, kind: output, shape index: {}]
  %s6 = sld [smem:[#allocation0]]
  $region50: #{tpu_custom_call.1} parent=0
    _
  %s8 = ssub.s32 1, %s6
  %s9 = scalar_select 0, %s8, %s6
  $region1: #{tpu_custom_call.1} parent=0
    #allocation2 [shape = 'u8[4096]{0}', space=vmem, size = 0x1000, scoped, tag = 'input window, operand 0, single buffered']
    #allocation3 [shape = 's32[1]{0}', space=sflag, size = 0x4, scoped, tag = 'scoped memory for tpu_custom_call.1']
    #allocation4 [shape = 's32[1]{0}', space=sflag, size = 0x4, scoped, tag = 'scoped memory for tpu_custom_call.1']
    #allocation5 [shape = 'u8[4096]{0}', space=vmem, size = 0x1000, scoped, tag = 'input window, operand 1, single buffered']
    #allocation6 [shape = 's32[1]{0}', space=sflag, size = 0x4, scoped, tag = 'scoped memory for tpu_custom_call.1']
    #allocation7 [shape = 'u8[4096]{0}', space=vmem, size = 0x1000, scoped, tag = 'input window, operand 2, single buffered']
    #allocation8 [shape = 'u8[16384]{0}', space=vmem, size = 0x4000, scoped, tag = 'input window, operand 3, single buffered']
    #allocation9 [shape = 's32[1]{0}', space=sflag, size = 0x4, scoped, tag = 'scoped memory for tpu_custom_call.1']
    #allocation10 [shape = 'u8[4096]{0}', space=vmem, size = 0x1000, scoped, tag = 'input window, operand 4, single buffered']
    #allocation11 [shape = 'u8[4096]{0}', space=vmem, size = 0x1000, scoped, tag = 'output window, operand 0, single buffered']
    %10 = vsyncpa [#allocation3], 0
    %11 = vsyncpa [#allocation6], 0
    %12 = vsyncpa [#allocation9], 0
    %13 = vsyncpa [#allocation4], 0
    // Predicated region
    $region2: #{tpu_custom_call.1} parent=1 // pred_check
      _
    $region3: #{tpu_custom_call.1} parent=1 // pred_check_branch
      %15 = sbr.rel (0) target = $region5
    $region4: #{tpu_custom_call.1} parent=1 // pred_region
      %17 = vsyncadd [#allocation3], 0
      %s19 = sshll.u32 %s0, 4
      %s20 = int_to_ptr.hbm [resolvable:$true] %s19
      %s21 = sshll.u32 [#allocation2], 4
      %s22 = int_to_ptr.vmem [resolvable:$true] %s21
      %24 = dma.hbm_to_vmem [thread:$0]  %s20, 128, %s22, [#allocation3]
    $region5: #{tpu_custom_call.1} parent=1 // pred_fallthru
      _
    // Predicated region
    $region6: #{tpu_custom_call.1} parent=1 // pred_check
      _
    $region7: #{tpu_custom_call.1} parent=1 // pred_check_branch
      %26 = sbr.rel (0) target = $region9
    $region8: #{tpu_custom_call.1} parent=1 // pred_region
      %28 = vsyncadd [#allocation6], 0
      %s30 = sshll.u32 %s1, 4
      %s31 = int_to_ptr.hbm [resolvable:$true] %s30
      %s32 = sshll.u32 [#allocation5], 4
      %s33 = int_to_ptr.vmem [resolvable:$true] %s32
      %35 = dma.hbm_to_vmem [thread:$0]  %s31, 128, %s33, [#allocation6]
    $region9: #{tpu_custom_call.1} parent=1 // pred_fallthru
      _
    // Predicated region
    $region10: #{tpu_custom_call.1} parent=1 // pred_check
      _
    $region11: #{tpu_custom_call.1} parent=1 // pred_check_branch
      %37 = sbr.rel (0) target = $region13
    $region12: #{tpu_custom_call.1} parent=1 // pred_region
      %39 = vsyncadd [#allocation6], 0
      %s41 = sshll.u32 %s2, 4
      %s42 = int_to_ptr.hbm [resolvable:$true] %s41
      %s43 = sshll.u32 [#allocation7], 4
      %s44 = int_to_ptr.vmem [resolvable:$true] %s43
      %46 = dma.hbm_to_vmem [thread:$0]  %s42, 128, %s44, [#allocation6]
    $region13: #{tpu_custom_call.1} parent=1 // pred_fallthru
      _
    // Predicated region
    $region14: #{tpu_custom_call.1} parent=1 // pred_check
      _
    $region15: #{tpu_custom_call.1} parent=1 // pred_check_branch
      %48 = sbr.rel (0) target = $region17
    $region16: #{tpu_custom_call.1} parent=1 // pred_region
      %50 = vsyncadd [#allocation9], 0
      %s51 = sshll.u32 %s3, 4
      %s52 = int_to_ptr.hbm [resolvable:$true] %s51
      %s53 = sshll.u32 [#allocation8], 4
      %s54 = int_to_ptr.vmem [resolvable:$true] %s53
      %59 = dma.hbm_to_vmem [thread:$0]  %s52, 512, %s54, [#allocation9], 128, 128, 8
    $region17: #{tpu_custom_call.1} parent=1 // pred_fallthru
      _
    // Predicated region
    $region18: #{tpu_custom_call.1} parent=1 // pred_check
      _
    $region19: #{tpu_custom_call.1} parent=1 // pred_check_branch
      %61 = sbr.rel (0) target = $region21
    $region20: #{tpu_custom_call.1} parent=1 // pred_region
      %63 = vsyncadd [#allocation9], 0
      %s65 = sshll.u32 %s4, 4
      %s66 = int_to_ptr.hbm [resolvable:$true] %s65
      %s67 = sshll.u32 [#allocation10], 4
      %s68 = int_to_ptr.vmem [resolvable:$true] %s67
      %70 = dma.hbm_to_vmem [thread:$0]  %s66, 128, %s68, [#allocation9]
    $region21: #{tpu_custom_call.1} parent=1 // pred_fallthru
      _
    // Predicated region
    $region22: #{tpu_custom_call.1} parent=1 // pred_check
      _
    $region23: #{tpu_custom_call.1} parent=1 // pred_check_branch
      %72 = sbr.rel (0) target = $region25
    $region24: #{tpu_custom_call.1} parent=1 // pred_region
      %74 = dma.done [#allocation3], 128
    $region25: #{tpu_custom_call.1} parent=1 // pred_fallthru
      _
    // Predicated region
    $region26: #{tpu_custom_call.1} parent=1 // pred_check
      _
    $region27: #{tpu_custom_call.1} parent=1 // pred_check_branch
      %76 = sbr.rel (0) target = $region29
    $region28: #{tpu_custom_call.1} parent=1 // pred_region
      %78 = dma.done [#allocation6], 128
    $region29: #{tpu_custom_call.1} parent=1 // pred_fallthru
      _
    // Predicated region
    $region30: #{tpu_custom_call.1} parent=1 // pred_check
      _
    $region31: #{tpu_custom_call.1} parent=1 // pred_check_branch
      %80 = sbr.rel (0) target = $region33
    $region32: #{tpu_custom_call.1} parent=1 // pred_region
      %82 = dma.done [#allocation6], 128
    $region33: #{tpu_custom_call.1} parent=1 // pred_fallthru
      _
    // Predicated region
    $region34: #{tpu_custom_call.1} parent=1 // pred_check
      _
    $region35: #{tpu_custom_call.1} parent=1 // pred_check_branch
      %84 = sbr.rel (0) target = $region37
    $region36: #{tpu_custom_call.1} parent=1 // pred_region
      %86 = dma.done [#allocation9], 512
    $region37: #{tpu_custom_call.1} parent=1 // pred_fallthru
      _
    // Predicated region
    $region38: #{tpu_custom_call.1} parent=1 // pred_check
      _
    $region39: #{tpu_custom_call.1} parent=1 // pred_check_branch
      %88 = sbr.rel (0) target = $region41
    $region40: #{tpu_custom_call.1} parent=1 // pred_region
      %90 = dma.done [#allocation9], 128
    $region41: #{tpu_custom_call.1} parent=1 // pred_fallthru
      _
    %v91 = vld [vmem:[#allocation2] sm:$0xff]
    %v92 = vld [vmem:[#allocation5] sm:$0xff]
    %v93 = vld [vmem:[#allocation7] sm:$0xff]
    %v94 = vld [vmem:[#allocation8] sm:$0xff]
    %v95 = vld [vmem:[#allocation8 + $0x8] sm:$0xff]
    %v96 = vld [vmem:[#allocation8 + $0x10] sm:$0xff]
    %v97 = vld [vmem:[#allocation8 + $0x18] sm:$0xff]
    %v98 = vld [vmem:[#allocation10] sm:$0xff]
    %vm99 = vcmask 130048
    %v101 = vsel %vm99, %v93, 0
    %v104 = vsel %vm99, %v98, 0
    %106 = vmatpush.xpose.msra.mxu0 0.0
    %107 = vmatpush.xpose.msra.mxu0 0.0
    %108 = vmatpush.xpose.msra.mxu0 0.0
    %109 = vmatpush.xpose.msra.mxu0 0.0
    %110 = vmatpush.xpose.msra.mxu0 0.0
    %111 = vmatpush.xpose.msra.mxu0 0.0
    %112 = vmatpush.xpose.msra.mxu0 0.0
    %113 = vmatpush.xpose.msra.mxu0 0.0
    %114 = vmatpush.xpose.msra.mxu0 0.0
    %115 = vmatpush.xpose.msra.mxu0 0.0
    %116 = vmatpush.xpose.msra.mxu0 0.0
    %117 = vmatpush.xpose.msra.mxu0 0.0
    %118 = vmatpush.xpose.msra.mxu0 0.0
    %119 = vmatpush.xpose.msra.mxu0 0.0
    %120 = vmatpush.xpose.msra.mxu0 0.0
    %121 = vmatpush.xpose.msra.mxu0 %v104
    %122 = vmatmul.f32.gmra.mxu0 %v101
    %v123 = vpop.f32.mrf.mxu0
    %v124 = vadd.f32 0.0, %v123
    %125 = vdwg.mxu0
    %v126 = vsub.f32 %v91, %v92
    %128 = vrot.lane.b32.xlu0 %v124, 24
    %v129 = vpop.permute.xlu0 %128
    %v131 = vsub.f32 %v91, %v129
    %vm132 = vcmask 64512
    %v133 = vsel %vm132, %v126, 0.0
    %vm134 = vcmask 195584
    %v135 = vsel %vm134, 0.0, %v131
    %v136 = vsub.f32 %v91, %v133
    %v137 = vsub.f32 %v136, %v135
    %v138 = vtanh.pop %v137
    %vm139 = vcmask 261120
    %v141 = vsel %vm139, %v138, 0
    %v144 = vsel %vm139, %v94, 0
    %v147 = vsel %vm139, %v95, 0
    %v150 = vsel %vm139, %v96, 0
    %v153 = vsel %vm139, %v97, 0
    %155 = vmatpush.xpose.msra.mxu0 0.0
    %156 = vmatpush.xpose.msra.mxu0 0.0
    %157 = vmatpush.xpose.msra.mxu0 0.0
    %158 = vmatpush.xpose.msra.mxu0 0.0
    %159 = vmatpush.xpose.msra.mxu0 0.0
    %160 = vmatpush.xpose.msra.mxu0 0.0
    %161 = vmatpush.xpose.msra.mxu0 0.0
    %162 = vmatpush.xpose.msra.mxu0 0.0
    %163 = vmatpush.xpose.msra.mxu0 0.0
    %164 = vmatpush.xpose.msra.mxu0 0.0
    %165 = vmatpush.xpose.msra.mxu0 0.0
    %166 = vmatpush.xpose.msra.mxu0 0.0
    %167 = vmatpush.xpose.msra.mxu0 %v153
    %168 = vmatpush.xpose.msra.mxu0 %v150
    %169 = vmatpush.xpose.msra.mxu0 %v147
    %170 = vmatpush.xpose.msra.mxu0 %v144
    %171 = vmatmul.f32.gmra.mxu0 %v141
    %v172 = vpop.f32.mrf.mxu0
    %v173 = vadd.f32 0.0, %v172
    %174 = vdwg.mxu0
    %176 = vrot.lane.b32.xlu0 %v126, 32
    %v177 = vpop.permute.xlu0 %176
    %180 = vrot.lane.b32.xlu0 %v131, 16
    %v181 = vpop.permute.xlu0 %180
    %v183 = vsel %vm139, %v173, %v177
    %vm184 = vcmask 326656
    %v185 = vsel %vm184, %v183, %v181
    %vm186 = vcmask 392192
    %v187 = vsel %vm186, %v185, 0.0
    %188 = vst [vmem:[#allocation11] sm:$0xff] %v187
    // Predicated region
    $region42: #{tpu_custom_call.1} parent=1 // pred_check
      _
    $region43: #{tpu_custom_call.1} parent=1 // pred_check_branch
      %190 = sbr.rel (0) target = $region45
    $region44: #{tpu_custom_call.1} parent=1 // pred_region
      %192 = vsyncadd [#allocation4], 0
      %s194 = sshll.u32 [#allocation11], 4
      %s195 = int_to_ptr.vmem [resolvable:$true] %s194
      %s196 = sshll.u32 %s5, 4
      %s197 = int_to_ptr.hbm [resolvable:$true] %s196
      %199 = dma.vmem_to_hbm [thread:$0]  %s195, 128, %s197, [#allocation4]
    $region45: #{tpu_custom_call.1} parent=1 // pred_fallthru
      _
    // Predicated region
    $region46: #{tpu_custom_call.1} parent=1 // pred_check
      _
    $region47: #{tpu_custom_call.1} parent=1 // pred_check_branch
      %201 = sbr.rel (0) target = $region49
    $region48: #{tpu_custom_call.1} parent=1 // pred_region
      %203 = dma.done [#allocation4], 128
    $region49: #{tpu_custom_call.1} parent=1 // pred_fallthru
      _
    %204 = vsyncpa [#allocation3], 1
    %205 = vsyncpa [#allocation6], 1
    %206 = vsyncpa [#allocation9], 1
    %207 = vsyncpa [#allocation4], 1

</llo_original>
